<compile_context>
chip_gen: v7x
topology: tpu7x:2x2x1
jax: 0.10.0
libtpu: 0.0.40
codegen_flags: <defaults>
</compile_context>

<pallas_src>
import functools

import jax
import jax.numpy as jnp
from jax.experimental import pallas as pl
from jax.experimental.pallas import tpu as pltpu


# ----------------------------------------------------------------------------
# Fused kernel: single dot (conv + e2conv) -> BatchNorm(batch stats) -> ReLU
# ----------------------------------------------------------------------------
def _fused_rpp_kernel(p_ref, w_ref, gamma_ref, beta_ref, o_ref, *, eps):
    # p_ref     : (K*K*Cin, B*H*W)   im2col patches, pixel axis lane-dense
    # w_ref     : (Cout, K*K*Cin)    pre-summed weight, columns (kh, kw, ci)
    # gamma_ref : (Cout, 1)
    # beta_ref  : (Cout, 1)
    # o_ref     : (B, Cout, H*W)
    B = o_ref.shape[0]
    HW = o_ref.shape[2]
    n = float(B * HW)

    # Single MXU dot: channels on sublanes, pixels on lanes (512 dense lanes).
    y = jnp.dot(w_ref[...], p_ref[...],
                preferred_element_type=jnp.float32)          # (Cout, B*H*W)

    # BatchNorm2d batch statistics in ONE pass (biased variance, PyTorch-style).
    inv_n = 1.0 / n
    mean = jnp.sum(y, axis=1, keepdims=True) * inv_n                 # (Cout, 1)
    var = jnp.sum(y * y, axis=1, keepdims=True) * inv_n - mean * mean
    inv = jax.lax.rsqrt(var + eps)

    # Fold affine into per-channel scale/shift: 2 VALU ops per element + ReLU.
    scale = gamma_ref[...] * inv                                     # (Cout, 1)
    shift = beta_ref[...] - mean * scale                             # (Cout, 1)
    out = jnp.maximum(y * scale + shift, 0.0)                # (Cout, B*H*W)

    for b in range(B):   # static unroll (B=2); 256-lane, 128-aligned stores
        o_ref[b] = out[:, b * HW:(b + 1) * HW]


# ----------------------------------------------------------------------------
# Wrapper: NCHW in / NCHW out, parameters in PyTorch (OIHW) convention.
# ----------------------------------------------------------------------------
@functools.partial(jax.jit, static_argnames=("eps",))
def rpp_block_forward(x_nchw, w_conv, b_conv, w_e2, b_e2, gamma, beta,
                      eps=1e-5):
    del b_conv, b_e2  # constant per-channel offsets cancel in batch-stat BN
    B, Cin, H, W = x_nchw.shape
    Cout, _, K, _ = w_conv.shape
    p = (K - 1) // 2
    HW = H * W

    x = x_nchw.astype(jnp.float32)
    x_pad = jnp.pad(x, ((0, 0), (0, 0), (p, p), (p, p)))

    # im2col in the wrapper (fused by XLA under jit):
    #   patches[(kh*K + kw)*Cin + ci, b*H*W + h*W + w] = x_pad[b, ci, h+kh, w+kw]
    slabs = []
    for kh in range(K):
        for kw in range(K):
            tap = x_pad[:, :, kh:kh + H, kw:kw + W]          # (B, Cin, H, W)
            slabs.append(
                jnp.transpose(tap, (1, 0, 2, 3)).reshape(Cin, B * HW))
    patches = jnp.concatenate(slabs, axis=0)                 # (K*K*Cin, B*HW)

    # conv(x, W1) + conv(x, W2) == conv(x, W1 + W2)   (linearity)
    w_sum = (w_conv + w_e2).astype(jnp.float32)              # (Cout, Cin, K, K)
    # columns ordered (kh, kw, ci) to match the patch-matrix rows
    w2d = jnp.transpose(w_sum, (0, 2, 3, 1)).reshape(Cout, K * K * Cin)

    out_flat = pl.pallas_call(
        functools.partial(_fused_rpp_kernel, eps=eps),
        out_shape=jax.ShapeDtypeStruct((B, Cout, HW), jnp.float32),
        grid_spec=pltpu.PrefetchScalarGridSpec(
            num_scalar_prefetch=0,
            grid=(1,),
            in_specs=[
                pl.BlockSpec((K * K * Cin, B * HW), lambda i: (0, 0)),
                pl.BlockSpec((Cout, K * K * Cin), lambda i: (0, 0)),
                pl.BlockSpec((Cout, 1), lambda i: (0, 0)),
                pl.BlockSpec((Cout, 1), lambda i: (0, 0)),
            ],
            out_specs=pl.BlockSpec((B, Cout, HW), lambda i: (0, 0, 0)),
        ),
        # Single grid step: BN needs full-batch statistics, so the whole
        # (tiny) problem is one block.  See header for the v7x scaling plan.
        compiler_params=pltpu.CompilerParams(
            dimension_semantics=("arbitrary",)),
    )(patches, w2d,
      gamma.reshape(Cout, 1).astype(jnp.float32),
      beta.reshape(Cout, 1).astype(jnp.float32))

    return out_flat.reshape(B, Cout, H, W)                   # reshape only


# ----------------------------------------------------------------------------
# Pure-JAX reference (same math, biases included to show they cancel).
# ----------------------------------------------------------------------------
def _reference(x, w1, b1, w2, b2, gamma, beta, eps=1e-5):
    dn = ('NCHW', 'OIHW', 'NCHW')
    p = (w1.shape[2] - 1) // 2
    c1 = jax.lax.conv_general_dilated(x, w1, (1, 1), [(p, p), (p, p)],
                                      dimension_numbers=dn)
    c1 = c1 + b1[None, :, None, None]
    c2 = jax.lax.conv_general_dilated(x, w2, (1, 1), [(p, p), (p, p)],
                                      dimension_numbers=dn)
    c2 = c2 + b2[None, :, None, None]
    out = c1 + c2
    mean = out.mean(axis=(0, 2, 3), keepdims=True)
    var = out.var(axis=(0, 2, 3), keepdims=True)             # biased, PyTorch
    out = (out - mean) / jnp.sqrt(var + eps)
    out = out * gamma[None, :, None, None] + beta[None, :, None, None]
    return jnp.maximum(out, 0.0)


if __name__ == "__main__":
    # Module hyperparameters: middle layer (first_layer=False, final_layer=False)
    in_frames, out_frames, N, K = 2, 2, 4, 3
    Cin = in_frames * N      # 8
    Cout = out_frames * N    # 8
    B, H, W = 2, 16, 16

    key = jax.random.PRNGKey(0)
    k_x, k_w1, k_b1, k_w2, k_b2 = jax.random.split(key, 5)

    x = jax.random.normal(k_x, (B, Cin, H, W), jnp.float32)
    # nn.Conv2d(in_frames*N, out_frames*N, K) weights, OIHW
    w_conv = 0.1 * jax.random.normal(k_w1, (Cout, Cin, K, K), jnp.float32)
    b_conv = 0.1 * jax.random.normal(k_b1, (Cout,), jnp.float32)
    # e2cnn.nn.R2Conv equivalent dense weight (same shape), OIHW
    w_e2 = 0.1 * jax.random.normal(k_w2, (Cout, Cin, K, K), jnp.float32)
    b_e2 = 0.1 * jax.random.normal(k_b2, (Cout,), jnp.float32)
    # BatchNorm2d default affine parameters
    gamma = jnp.ones((Cout,), jnp.float32)
    beta = jnp.zeros((Cout,), jnp.float32)

    out = rpp_block_forward(x, w_conv, b_conv, w_e2, b_e2, gamma, beta)
    out = jax.block_until_ready(out)

    ref = _reference(x, w_conv, b_conv, w_e2, b_e2, gamma, beta)
    assert out.shape == (B, Cout, H, W)
    err = float(jnp.max(jnp.abs(out - ref)))
    assert jnp.allclose(out, ref, rtol=1e-4, atol=1e-4), err

    print("KERNEL_OK")
</pallas_src>

<mosaic_0001>
module attributes {stable_mosaic.version = 11 : i64} {
  func.func @_fused_rpp_kernel(%arg0: i32, %arg1: memref<72x512xf32, #tpu.memory_space<vmem>>, %arg2: memref<8x72xf32, #tpu.memory_space<vmem>>, %arg3: memref<8x1xf32, #tpu.memory_space<vmem>>, %arg4: memref<8x1xf32, #tpu.memory_space<vmem>>, %arg5: memref<2x8x256xf32, #tpu.memory_space<vmem>>) attributes {dimension_semantics = [#tpu.dimension_semantics<arbitrary>], iteration_bounds = array<i64: 1>, scalar_prefetch = 0 : i64, scratch_operands = 0 : i64, tpu.core_type = #tpu.core_type<tc>, window_params = [{pipeline_mode = #tpu.pipeline_mode<synchronous>, transform_indices = @transform_0, window_bounds = array<i64: 72, 512>}, {pipeline_mode = #tpu.pipeline_mode<synchronous>, transform_indices = @transform_1, window_bounds = array<i64: 8, 72>}, {pipeline_mode = #tpu.pipeline_mode<synchronous>, transform_indices = @transform_2, window_bounds = array<i64: 8, 1>}, {pipeline_mode = #tpu.pipeline_mode<synchronous>, transform_indices = @transform_3, window_bounds = array<i64: 8, 1>}, {pipeline_mode = #tpu.pipeline_mode<synchronous>, transform_indices = @transform_4, window_bounds = array<i64: 2, 8, 256>}]} {
    %c0 = arith.constant 0 : index
    %c0_0 = arith.constant 0 : index
    %0 = vector.load %arg2[%c0, %c0_0] : memref<8x72xf32, #tpu.memory_space<vmem>>, vector<8x72xf32>
    %c0_1 = arith.constant 0 : index
    %c0_2 = arith.constant 0 : index
    %1 = vector.load %arg1[%c0_1, %c0_2] : memref<72x512xf32, #tpu.memory_space<vmem>>, vector<72x512xf32>
    %cst = arith.constant dense<0.000000e+00> : vector<8x512xf32>
    %2 = tpu.matmul %0, %1, %cst {dimension_numbers = #tpu.dot_dimension_numbers<[1], [0], [0], [1], [0, 0, 1, 1], [], []>} : vector<8x72xf32>, vector<72x512xf32>, vector<8x512xf32> -> vector<8x512xf32>
    %cst_3 = arith.constant dense<0.000000e+00> : vector<8xf32>
    %3 = vector.multi_reduction <add>, %2, %cst_3 [1] : vector<8x512xf32> to vector<8xf32>
    %4 = vector.shape_cast %3 : vector<8xf32> to vector<8x1xf32>
    %cst_4 = arith.constant 0.001953125 : f32
    %5 = vector.broadcast %cst_4 : f32 to vector<8x1xf32>
    %6 = arith.mulf %4, %5 : vector<8x1xf32>
    %7 = arith.mulf %2, %2 : vector<8x512xf32>
    %cst_5 = arith.constant dense<0.000000e+00> : vector<8xf32>
    %8 = vector.multi_reduction <add>, %7, %cst_5 [1] : vector<8x512xf32> to vector<8xf32>
    %9 = vector.shape_cast %8 : vector<8xf32> to vector<8x1xf32>
    %cst_6 = arith.constant 0.001953125 : f32
    %10 = vector.broadcast %cst_6 : f32 to vector<8x1xf32>
    %11 = arith.mulf %9, %10 : vector<8x1xf32>
    %12 = arith.mulf %6, %6 : vector<8x1xf32>
    %13 = arith.subf %11, %12 : vector<8x1xf32>
    %cst_7 = arith.constant 9.99999974E-6 : f32
    %14 = vector.broadcast %cst_7 : f32 to vector<8x1xf32>
    %15 = arith.addf %13, %14 : vector<8x1xf32>
    %16 = math.rsqrt %15 : vector<8x1xf32>
    %c0_8 = arith.constant 0 : index
    %c0_9 = arith.constant 0 : index
    %17 = vector.load %arg3[%c0_8, %c0_9] : memref<8x1xf32, #tpu.memory_space<vmem>>, vector<8x1xf32>
    %18 = arith.mulf %17, %16 : vector<8x1xf32>
    %c0_10 = arith.constant 0 : index
    %c0_11 = arith.constant 0 : index
    %19 = vector.load %arg4[%c0_10, %c0_11] : memref<8x1xf32, #tpu.memory_space<vmem>>, vector<8x1xf32>
    %20 = arith.mulf %6, %18 : vector<8x1xf32>
    %21 = arith.subf %19, %20 : vector<8x1xf32>
    %22 = vector.broadcast %18 : vector<8x1xf32> to vector<8x512xf32>
    %23 = arith.mulf %2, %22 : vector<8x512xf32>
    %24 = vector.broadcast %21 : vector<8x1xf32> to vector<8x512xf32>
    %25 = arith.addf %23, %24 : vector<8x512xf32>
    %cst_12 = arith.constant 0.000000e+00 : f32
    %26 = vector.broadcast %cst_12 : f32 to vector<8x512xf32>
    %27 = arith.maximumf %25, %26 : vector<8x512xf32>
    %28 = vector.extract_strided_slice %27 {offsets = [0, 0], sizes = [8, 256], strides = [1, 1]} : vector<8x512xf32> to vector<8x256xf32>
    %c0_13 = arith.constant 0 : index
    %c0_14 = arith.constant 0 : index
    %c0_15 = arith.constant 0 : index
    %29 = vector.load %arg5[%c0_13, %c0_14, %c0_15] : memref<2x8x256xf32, #tpu.memory_space<vmem>>, vector<1x8x256xf32>
    %30 = vector.shape_cast %29 : vector<1x8x256xf32> to vector<8x256xf32>
    %31 = vector.shape_cast %28 : vector<8x256xf32> to vector<1x8x256xf32>
    tpu.vector_store %arg5[%c0_13, %c0_14, %c0_15], %31 {strides = array<i32>} : memref<2x8x256xf32, #tpu.memory_space<vmem>>, vector<1x8x256xf32>,
    %32 = vector.extract_strided_slice %27 {offsets = [0, 256], sizes = [8, 256], strides = [1, 1]} : vector<8x512xf32> to vector<8x256xf32>
    %c1 = arith.constant 1 : index
    %c0_16 = arith.constant 0 : index
    %c0_17 = arith.constant 0 : index
    %33 = vector.load %arg5[%c1, %c0_16, %c0_17] : memref<2x8x256xf32, #tpu.memory_space<vmem>>, vector<1x8x256xf32>
    %34 = vector.shape_cast %33 : vector<1x8x256xf32> to vector<8x256xf32>
    %35 = vector.shape_cast %32 : vector<8x256xf32> to vector<1x8x256xf32>
    tpu.vector_store %arg5[%c1, %c0_16, %c0_17], %35 {strides = array<i32>} : memref<2x8x256xf32, #tpu.memory_space<vmem>>, vector<1x8x256xf32>,
    return
  }
  func.func @transform_0(%arg0: i32) -> (i32, i32) {
    %c0_i32 = arith.constant 0 : i32
    %c0_i32_0 = arith.constant 0 : i32
    %c0_i32_1 = arith.constant 0 : i32
    return %c0_i32, %c0_i32_0 : i32, i32
  }
  func.func @transform_1(%arg0: i32) -> (i32, i32) {
    %c0_i32 = arith.constant 0 : i32
    %c0_i32_0 = arith.constant 0 : i32
    %c0_i32_1 = arith.constant 0 : i32
    return %c0_i32, %c0_i32_0 : i32, i32
  }
  func.func @transform_2(%arg0: i32) -> (i32, i32) {
    %c0_i32 = arith.constant 0 : i32
    %c0_i32_0 = arith.constant 0 : i32
    %c0_i32_1 = arith.constant 0 : i32
    return %c0_i32, %c0_i32_0 : i32, i32
  }
  func.func @transform_3(%arg0: i32) -> (i32, i32) {
    %c0_i32 = arith.constant 0 : i32
    %c0_i32_0 = arith.constant 0 : i32
    %c0_i32_1 = arith.constant 0 : i32
    return %c0_i32, %c0_i32_0 : i32, i32
  }
  func.func @transform_4(%arg0: i32) -> (i32, i32, i32) {
    %c0_i32 = arith.constant 0 : i32
    %c0_i32_0 = arith.constant 0 : i32
    %c0_i32_1 = arith.constant 0 : i32
    %c0_i32_2 = arith.constant 0 : i32
    return %c0_i32, %c0_i32_0, %c0_i32_1 : i32, i32, i32
  }
}

</mosaic_0001>

<llo_original>
// kernel: rpp_block_forward.1
$region0: #{rpp_block_forward.1}
  #allocation0 [shape = 'u32[]', space=smem, size = 0x4, offset = 0x4, fixed_abs, tag = 'smem constant byte address 0x4 - core index']
  #allocation1 [shape = 'u32[144,128]{1,0:T(1,128)}', space=vmem, size = 0x12000, scoped, tag = 'internal scratch']
  %s0 = inlined_call_operand.vmem [shape: f32[72,512], index: 0, kind: input, shape index: {}]
  %s1 = inlined_call_operand.vmem [shape: f32[8,72], index: 1, kind: input, shape index: {}]
  %s2 = inlined_call_operand.vmem [shape: f32[8,1], index: 2, kind: input, shape index: {}]
  %s3 = inlined_call_operand.vmem [shape: f32[8,1], index: 3, kind: input, shape index: {}]
  %s4 = inlined_call_operand.vmem [shape: f32[2,8,256], index: 4, kind: output, shape index: {}]
  %s5 = sld [smem:[#allocation0]]
  $region26: #{rpp_block_forward.1} parent=0
    _
  %s7 = ssub.s32 1, %s5
  %s8 = scalar_select 0, %s7, %s5
  // Predicated region
  $region2: #{rpp_block_forward.1} parent=0 // pred_check
    _
  $region3: #{rpp_block_forward.1} parent=0 // pred_check_branch
    %10 = sbr.rel (0) target = $region5
  $region4: #{rpp_block_forward.1} parent=0 // pred_region
    _
  $region5: #{rpp_block_forward.1} parent=0 // pred_fallthru
    _
  // Predicated region
  $region6: #{rpp_block_forward.1} parent=0 // pred_check
    _
  $region7: #{rpp_block_forward.1} parent=0 // pred_check_branch
    %12 = sbr.rel (0) target = $region9
  $region8: #{rpp_block_forward.1} parent=0 // pred_region
    _
  $region9: #{rpp_block_forward.1} parent=0 // pred_fallthru
    _
  // Predicated region
  $region10: #{rpp_block_forward.1} parent=0 // pred_check
    _
  $region11: #{rpp_block_forward.1} parent=0 // pred_check_branch
    %14 = sbr.rel (0) target = $region13
  $region12: #{rpp_block_forward.1} parent=0 // pred_region
    _
  $region13: #{rpp_block_forward.1} parent=0 // pred_fallthru
    _
  // Predicated region
  $region14: #{rpp_block_forward.1} parent=0 // pred_check
    _
  $region15: #{rpp_block_forward.1} parent=0 // pred_check_branch
    %16 = sbr.rel (0) target = $region17
  $region16: #{rpp_block_forward.1} parent=0 // pred_region
    _
  $region17: #{rpp_block_forward.1} parent=0 // pred_fallthru
    _
  %v17 = vld [vmem:[%s1] sm:$0xff]
  %v18 = vld [vmem:[%s0] sm:$0xff]
  %v19 = vld [vmem:[%s0 + $0x8] sm:$0xff]
  %v20 = vld [vmem:[%s0 + $0x10] sm:$0xff]
  %v21 = vld [vmem:[%s0 + $0x18] sm:$0xff]
  %v22 = vld [vmem:[%s0 + $0x20] sm:$0xff]
  %v23 = vld [vmem:[%s0 + $0x28] sm:$0xff]
  %v24 = vld [vmem:[%s0 + $0x30] sm:$0xff]
  %v25 = vld [vmem:[%s0 + $0x38] sm:$0xff]
  %v26 = vld [vmem:[%s0 + $0x40] sm:$0xff]
  %v27 = vld [vmem:[%s0 + $0x48] sm:$0xff]
  %v28 = vld [vmem:[%s0 + $0x50] sm:$0xff]
  %v29 = vld [vmem:[%s0 + $0x58] sm:$0xff]
  %v30 = vld [vmem:[%s0 + $0x60] sm:$0xff]
  %v31 = vld [vmem:[%s0 + $0x68] sm:$0xff]
  %v32 = vld [vmem:[%s0 + $0x70] sm:$0xff]
  %v33 = vld [vmem:[%s0 + $0x78] sm:$0xff]
  %v34 = vld [vmem:[%s0 + $0x80] sm:$0xff]
  %v35 = vld [vmem:[%s0 + $0x88] sm:$0xff]
  %v36 = vld [vmem:[%s0 + $0x90] sm:$0xff]
  %v37 = vld [vmem:[%s0 + $0x98] sm:$0xff]
  %v38 = vld [vmem:[%s0 + $0xa0] sm:$0xff]
  %v39 = vld [vmem:[%s0 + $0xa8] sm:$0xff]
  %v40 = vld [vmem:[%s0 + $0xb0] sm:$0xff]
  %v41 = vld [vmem:[%s0 + $0xb8] sm:$0xff]
  %v42 = vld [vmem:[%s0 + $0xc0] sm:$0xff]
  %v43 = vld [vmem:[%s0 + $0xc8] sm:$0xff]
  %v44 = vld [vmem:[%s0 + $0xd0] sm:$0xff]
  %v45 = vld [vmem:[%s0 + $0xd8] sm:$0xff]
  %v46 = vld [vmem:[%s0 + $0xe0] sm:$0xff]
  %v47 = vld [vmem:[%s0 + $0xe8] sm:$0xff]
  %v48 = vld [vmem:[%s0 + $0xf0] sm:$0xff]
  %v49 = vld [vmem:[%s0 + $0xf8] sm:$0xff]
  %v50 = vld [vmem:[%s0 + $0x100] sm:$0xff]
  %v51 = vld [vmem:[%s0 + $0x108] sm:$0xff]
  %v52 = vld [vmem:[%s0 + $0x110] sm:$0xff]
  %v53 = vld [vmem:[%s0 + $0x118] sm:$0xff]
  %vm54 = vcmask 588800
  %v56 = vsel %vm54, %v17, 0
  %58 = vmatprep.subr.mxu0 %v19
  %59 = vmatpush1.msra.mxu0 %v18
  %60 = vmatprep.subr.mxu0 %v23
  %61 = vmatpush1.msra.mxu0 %v22
  %62 = vmatprep.subr.mxu0 %v27
  %63 = vmatpush1.msra.mxu0 %v26
  %64 = vmatprep.subr.mxu0 %v31
  %65 = vmatpush1.msra.mxu0 %v30
  %66 = vmatprep.subr.mxu0 %v35
  %67 = vmatpush1.msra.mxu0 %v34
  %68 = vmatprep.subr.mxu0 %v39
  %69 = vmatpush1.msra.mxu0 %v38
  %70 = vmatprep.subr.mxu0 %v43
  %71 = vmatpush1.msra.mxu0 %v42
  %72 = vmatprep.subr.mxu0 %v47
  %73 = vmatpush1.msra.mxu0 %v46
  %74 = vmatprep.subr.mxu0 %v51
  %75 = vmatpush1.msra.mxu0 %v50
  %76 = vmatprep.subr.mxu0 0.0
  %77 = vmatpush1.msra.mxu0 0.0
  %78 = vmatprep.subr.mxu0 0.0
  %79 = vmatpush1.msra.mxu0 0.0
  %80 = vmatprep.subr.mxu0 0.0
  %81 = vmatpush1.msra.mxu0 0.0
  %82 = vmatprep.subr.mxu0 0.0
  %83 = vmatpush1.msra.mxu0 0.0
  %84 = vmatprep.subr.mxu0 0.0
  %85 = vmatpush1.msra.mxu0 0.0
  %86 = vmatprep.subr.mxu0 0.0
  %87 = vmatpush1.msra.mxu0 0.0
  %88 = vmatprep.subr.mxu0 0.0
  %89 = vmatpush1.msra.mxu0 0.0
  %90 = vmatprep.subr.mxu0 0.0
  %91 = vmatpush1.msra.mxu0 0.0
  %92 = vmatprep.subr.mxu0 0.0
  %93 = vmatpush1.msra.mxu0 0.0
  %94 = vmatprep.subr.mxu0 0.0
  %95 = vmatpush1.msra.mxu0 0.0
  %96 = vmatprep.subr.mxu0 0.0
  %97 = vmatpush1.msra.mxu0 0.0
  %98 = vmatprep.subr.mxu0 0.0
  %99 = vmatpush1.msra.mxu0 0.0
  %100 = vmatprep.subr.mxu0 0.0
  %101 = vmatpush1.msra.mxu0 0.0
  %102 = vmatprep.subr.mxu0 0.0
  %103 = vmatpush1.msra.mxu0 0.0
  %104 = vmatprep.subr.mxu0 0.0
  %105 = vmatpush1.msra.mxu0 0.0
  %106 = vmatprep.subr.mxu0 0.0
  %107 = vmatpush1.msra.mxu0 0.0
  %108 = vmatprep.subr.mxu0 0.0
  %109 = vmatpush1.msra.mxu0 0.0
  %110 = vmatprep.subr.mxu0 0.0
  %111 = vmatpush1.msra.mxu0 0.0
  %112 = vmatprep.subr.mxu0 0.0
  %113 = vmatpush1.msra.mxu0 0.0
  %114 = vmatprep.subr.mxu0 0.0
  %115 = vmatpush1.msra.mxu0 0.0
  %116 = vmatprep.subr.mxu0 0.0
  %117 = vmatpush1.msra.mxu0 0.0
  %118 = vmatprep.subr.mxu0 0.0
  %119 = vmatpush1.msra.mxu0 0.0
  %120 = vmatprep.subr.mxu0 0.0
  %121 = vmatpush1.msra.mxu0 0.0
  %122 = vmatprep.mubr.f32.mxu0 0.0
  %123 = vmatmul.mubr.f32.gmra.mrb[0].mxu0 %v56
  %v124 = vpop.f32.mrb[0].mxu0
  %v125 = vadd.f32 0.0, %v124
  %v126 = vpop.f32.mrb[0].mxu0
  %v127 = vadd.f32 0.0, %v126
  %128 = vdwg.mxu0
  %129 = vmatprep.subr.mxu0 %v21
  %130 = vmatpush1.msra.mxu0 %v20
  %131 = vmatprep.subr.mxu0 %v25
  %132 = vmatpush1.msra.mxu0 %v24
  %133 = vmatprep.subr.mxu0 %v29
  %134 = vmatpush1.msra.mxu0 %v28
  %135 = vmatprep.subr.mxu0 %v33
  %136 = vmatpush1.msra.mxu0 %v32
  %137 = vmatprep.subr.mxu0 %v37
  %138 = vmatpush1.msra.mxu0 %v36
  %139 = vmatprep.subr.mxu0 %v41
  %140 = vmatpush1.msra.mxu0 %v40
  %141 = vmatprep.subr.mxu0 %v45
  %142 = vmatpush1.msra.mxu0 %v44
  %143 = vmatprep.subr.mxu0 %v49
  %144 = vmatpush1.msra.mxu0 %v48
  %145 = vmatprep.subr.mxu0 %v53
  %146 = vmatpush1.msra.mxu0 %v52
  %147 = vmatprep.subr.mxu0 0.0
  %148 = vmatpush1.msra.mxu0 0.0
  %149 = vmatprep.subr.mxu0 0.0
  %150 = vmatpush1.msra.mxu0 0.0
  %151 = vmatprep.subr.mxu0 0.0
  %152 = vmatpush1.msra.mxu0 0.0
  %153 = vmatprep.subr.mxu0 0.0
  %154 = vmatpush1.msra.mxu0 0.0
  %155 = vmatprep.subr.mxu0 0.0
  %156 = vmatpush1.msra.mxu0 0.0
  %157 = vmatprep.subr.mxu0 0.0
  %158 = vmatpush1.msra.mxu0 0.0
  %159 = vmatprep.subr.mxu0 0.0
  %160 = vmatpush1.msra.mxu0 0.0
  %161 = vmatprep.subr.mxu0 0.0
  %162 = vmatpush1.msra.mxu0 0.0
  %163 = vmatprep.subr.mxu0 0.0
  %164 = vmatpush1.msra.mxu0 0.0
  %165 = vmatprep.subr.mxu0 0.0
  %166 = vmatpush1.msra.mxu0 0.0
  %167 = vmatprep.subr.mxu0 0.0
  %168 = vmatpush1.msra.mxu0 0.0
  %169 = vmatprep.subr.mxu0 0.0
  %170 = vmatpush1.msra.mxu0 0.0
  %171 = vmatprep.subr.mxu0 0.0
  %172 = vmatpush1.msra.mxu0 0.0
  %173 = vmatprep.subr.mxu0 0.0
  %174 = vmatpush1.msra.mxu0 0.0
  %175 = vmatprep.subr.mxu0 0.0
  %176 = vmatpush1.msra.mxu0 0.0
  %177 = vmatprep.subr.mxu0 0.0
  %178 = vmatpush1.msra.mxu0 0.0
  %179 = vmatprep.subr.mxu0 0.0
  %180 = vmatpush1.msra.mxu0 0.0
  %181 = vmatprep.subr.mxu0 0.0
  %182 = vmatpush1.msra.mxu0 0.0
  %183 = vmatprep.subr.mxu0 0.0
  %184 = vmatpush1.msra.mxu0 0.0
  %185 = vmatprep.subr.mxu0 0.0
  %186 = vmatpush1.msra.mxu0 0.0
  %187 = vmatprep.subr.mxu0 0.0
  %188 = vmatpush1.msra.mxu0 0.0
  %189 = vmatprep.subr.mxu0 0.0
  %190 = vmatpush1.msra.mxu0 0.0
  %191 = vmatprep.subr.mxu0 0.0
  %192 = vmatpush1.msra.mxu0 0.0
  %193 = vmatprep.mubr.f32.mxu0 0.0
  %194 = vmatmul.mubr.f32.gmra.mrb[0].mxu0 %v56
  %v195 = vpop.f32.mrb[0].mxu0
  %v196 = vadd.f32 0.0, %v195
  %v197 = vpop.f32.mrb[0].mxu0
  %v198 = vadd.f32 0.0, %v197
  %199 = vdwg.mxu0
  %v200 = vadd.f32 %v125, %v127
  %v201 = vadd.f32 %v200, %v196
  %v202 = vadd.f32 %v201, %v198
  %203 = vadd.xlane.f32.xlu0 %v202
  %v204 = vpop.xlane.xlu0 %203
  %v205 = vmul.f32 %v204, 0.001953125
  %v206 = vmul.f32 %v125, %v125
  %v207 = vmul.f32 %v127, %v127
  %v208 = vmul.f32 %v196, %v196
  %v209 = vmul.f32 %v198, %v198
  %v210 = vadd.f32 %v206, %v207
  %v211 = vadd.f32 %v210, %v208
  %v212 = vadd.f32 %v211, %v209
  %213 = vadd.xlane.f32.xlu0 %v212
  %v214 = vpop.xlane.xlu0 %213
  %v215 = vmul.f32 %v214, 0.001953125
  %v216 = vmul.f32 %v205, %v205
  %v217 = vsub.f32 %v215, %v216
  %v218 = vadd.f32 %v217, 1e-05
  %v219 = vrsqrt.pop %v218
  %v220 = vld [vmem:[%s2] sm:$0xff]
  %v221 = vmul.f32 %v220, %v219
  %v222 = vld [vmem:[%s3] sm:$0xff]
  %v223 = vmul.f32 %v205, %v221
  %v224 = vsub.f32 %v222, %v223
  %226 = vset.pattern.permute.xlu0 0
  %227 = vperm.xlu0 %226, %v221
  %v228 = vpop.permute.xlu0 %227
  %v230 = vmul.f32 %v125, %v228
  %v231 = vmul.f32 %v127, %v228
  %v232 = vmul.f32 %v196, %v228
  %v233 = vmul.f32 %v198, %v228
  %235 = vset.pattern.permute.xlu0 0
  %236 = vperm.xlu0 %235, %v224
  %v237 = vpop.permute.xlu0 %236
  %v239 = vadd.f32 %v230, %v237
  %v240 = vadd.f32 %v231, %v237
  %v241 = vadd.f32 %v232, %v237
  %v242 = vadd.f32 %v233, %v237
  %v243 = vmax.f32 %v239, 0.0
  %v244 = vmax.f32 %v240, 0.0
  %v245 = vmax.f32 %v241, 0.0
  %v246 = vmax.f32 %v242, 0.0
  %247 = vst [vmem:[%s4] sm:$0xff] %v243
  %248 = vst [vmem:[%s4 + $0x8] sm:$0xff] %v244
  %s249 = scalar_lea.vmem %s4, 16
  %250 = vst [vmem:[%s249] sm:$0xff] %v245
  %251 = vst [vmem:[%s249 + $0x8] sm:$0xff] %v246
  // Predicated region
  $region18: #{rpp_block_forward.1} parent=0 // pred_check
    _
  $region19: #{rpp_block_forward.1} parent=0 // pred_check_branch
    %253 = sbr.rel (0) target = $region21
  $region20: #{rpp_block_forward.1} parent=0 // pred_region
    _
  $region21: #{rpp_block_forward.1} parent=0 // pred_fallthru
    _
  // Predicated region
  $region22: #{rpp_block_forward.1} parent=0 // pred_check
    _
  $region23: #{rpp_block_forward.1} parent=0 // pred_check_branch
    %255 = sbr.rel (0) target = $region25
  $region24: #{rpp_block_forward.1} parent=0 // pred_region
    _
  $region25: #{rpp_block_forward.1} parent=0 // pred_fallthru
    _

</llo_original>
